<compile_context>
chip_gen: v5e
topology: v5e:2x2
jax: 0.10.0
libtpu: 0.0.40
codegen_flags: <defaults>
</compile_context>

<pallas_src>
import math
import functools

import jax
import jax.numpy as jnp
from jax.experimental import pallas as pl
from jax.experimental.pallas import tpu as pltpu


_SQRT_HALF = 1.0 / math.sqrt(2.0)


def _round_up(x, m):
    return ((x + m - 1) // m) * m


def _vmem_capacity_bytes():
    """Physical per-core VMEM; falls back to the smallest chip (v7x, 64 MiB)."""
    try:
        cap = getattr(pltpu.get_tpu_info(), "vmem_capacity_bytes", None)
        if cap:
            return int(cap)
    except Exception:
        pass
    return 64 * 1024 * 1024


# ---------------------------------------------------------------------------
# Kernels
# ---------------------------------------------------------------------------

def _gelu_layernorm(h, g, beta, eps):
    """Exact-erf GELU + TF-style LayerNorm on an f32 (tm, H) tile."""
    # GELU: x * 0.5 * (1 + erf(x / sqrt(2)))  -- matches the PyTorch gelu().
    # TODO(synk): on v6e/v7x the GELU multiplies could run in bf16 VALU (2x
    # elementwise throughput), keeping only mean/var/rsqrt in f32.
    h = h * (0.5 * (1.0 + jax.lax.erf(h * _SQRT_HALF)))
    # Single-pass LayerNorm statistics: E[h] and E[h*h] have no data
    # dependency, so the two reductions overlap and the serialized (h - mu)
    # pass before the variance reduce is eliminated.  Clamp the E[x^2]-mu^2
    # cancellation before adding the tiny eps.
    mu = jnp.mean(h, axis=-1, keepdims=True)
    ms = jnp.mean(h * h, axis=-1, keepdims=True)
    var = jnp.maximum(ms - mu * mu, 0.0)
    r = jax.lax.rsqrt(var + eps)                  # rsqrt rides the EUP slot
    return (h - mu) * (g * r) + beta


def _dense_kernel(x_ref, w_ref, b_ref, g_ref, beta_ref, o_ref, *, eps):
    """Fused Linear + GELU + LayerNorm with the whole (H, H) weight resident."""
    # MXU matmul in the operands' native dtype (bf16 fast path), f32 accum.
    # TODO(synk): optionally cast f32 x/w tiles to bf16 here (precision-gated)
    # to recover ~3x MXU throughput for f32 weights.
    h = jnp.dot(x_ref[...], w_ref[...], preferred_element_type=jnp.float32)
    h = h + b_ref[...].astype(jnp.float32)
    out = _gelu_layernorm(h, g_ref[...].astype(jnp.float32),
                          beta_ref[...].astype(jnp.float32), eps)
    o_ref[...] = out.astype(o_ref.dtype)


def _ktiled_kernel(x_ref, w_ref, b_ref, g_ref, beta_ref, o_ref, acc_ref, *, eps):
    """K-tiled variant: accumulate partial matmuls, finalize on last K step."""
    k = pl.program_id(1)

    @pl.when(k == 0)
    def _():
        acc_ref[...] = jnp.zeros_like(acc_ref)

    acc_ref[...] += jnp.dot(x_ref[...], w_ref[...],
                            preferred_element_type=jnp.float32)

    @pl.when(k == pl.num_programs(1) - 1)
    def _():
        h = acc_ref[...] + b_ref[...].astype(jnp.float32)
        out = _gelu_layernorm(h, g_ref[...].astype(jnp.float32),
                              beta_ref[...].astype(jnp.float32), eps)
        o_ref[...] = out.astype(o_ref.dtype)


# ---------------------------------------------------------------------------
# Tiling / VMEM planning
# ---------------------------------------------------------------------------

def _plan(M, H, x_dtype, w_dtype, tm_request, budget, force_k_tiling):
    """Pick (tm, tk_or_None, vmem_need) under the per-chip VMEM budget."""
    x_item = jnp.dtype(x_dtype).itemsize
    w_item = jnp.dtype(w_dtype).itemsize
    # Dtype sublane pack: 8 for f32, 16 for bf16/f16, 32 for int8/fp8.
    pack = max(8, 32 // x_item)

    tm = max(pack, _round_up(min(tm_request, _round_up(M, pack)), pack))
    # Keep both v7x TensorCores busy: make the "parallel" row grid >= 2 steps.
    if M > 128 and pl.cdiv(M, tm) == 1:
        tm = max(pack, _round_up(pl.cdiv(M, 2), pack))

    # Pallas double-buffers every pipelined input by default, including the
    # grid-invariant weight / bias / gamma / beta blocks -> count them 2x.
    # TODO(synk): pipeline_mode=pl.Buffered(1) on those constant BlockSpecs
    # would drop this factor back to 1x once single-buffering is relied upon.
    vec_bytes = 2 * 3 * H * w_item
    dense_const = 2 * H * H * w_item + vec_bytes

    def need_dense(t):
        return (dense_const
                + 4 * t * H * x_item        # 2x double-buffered x + out tiles
                + 3 * t * H * 4)            # f32 epilogue temporaries

    def need_ktiled(t, tk):
        return (2 * tk * H * w_item         # double-buffered weight K-slab
                + vec_bytes
                + 2 * t * tk * x_item       # double-buffered x tile
                + 2 * t * H * x_item        # double-buffered out tile
                + t * H * 4                 # f32 accumulator scratch
                + 3 * t * H * 4)            # f32 epilogue temporaries

    k_candidates = [tk for tk in (4096, 2048, 1024, 512, 256, 128)
                    if tk < H and H % tk == 0]
    use_ktiled = bool(k_candidates) and (
        force_k_tiling or dense_const > 0.6 * budget)

    if not use_ktiled:
        # NOTE: if H is huge and not a multiple of 128 we cannot K-tile
        # safely; we just shrink tm and rely on vmem_limit_bytes.
        while need_dense(tm) > budget and tm > pack:
            tm = max(pack, _round_up(tm // 2, pack))
        return tm, None, need_dense(tm)

    tk = k_candidates[0]
    while need_ktiled(tm, tk) > budget and tk > 128:
        tk //= 2
    while need_ktiled(tm, tk) > budget and tm > pack:
        tm = max(pack, _round_up(tm // 2, pack))
    return tm, tk, need_ktiled(tm, tk)


# ---------------------------------------------------------------------------
# Host wrappers
# ---------------------------------------------------------------------------

def prediction_head_transform(x2d, w, b, gamma, beta, *, eps=1e-12, tm=256,
                              force_k_tiling=False):
    """Fused Linear + GELU + LayerNorm on an (M, H) slab via one pallas_call."""
    M, H = x2d.shape
    cap = _vmem_capacity_bytes()
    budget = int(cap * 0.70)            # ~44 MiB on v7x, ~90 MiB on v5e/v6e
    tm, tk, vmem_need = _plan(M, H, x2d.dtype, w.dtype, tm, budget,
                              force_k_tiling)

    # H that is a multiple of 128 gives lane-dense (unmasked) output stores;
    # smaller H still works because a full-extent block dim is allowed.
    b2 = b.reshape(1, H)
    g2 = gamma.reshape(1, H)
    be2 = beta.reshape(1, H)

    x_item = jnp.dtype(x2d.dtype).itemsize
    w_item = jnp.dtype(w.dtype).itemsize
    cost = pl.CostEstimate(
        flops=2 * M * H * H + 12 * M * H,
        transcendentals=M * H + M,              # erf per element + rsqrt per row
        bytes_accessed=2 * M * H * x_item + (H * H + 3 * H) * w_item,
    )

    # Always emit an explicit scoped-VMEM limit (v5e's default is only 16 MiB);
    # floor at 32 MiB, ceiling comfortably under physical capacity.
    vmem_limit = int(min(cap * 0.85, max(vmem_need + (8 << 20), 32 << 20)))

    if tk is None:
        grid_spec = pltpu.PrefetchScalarGridSpec(
            num_scalar_prefetch=0,
            grid=(pl.cdiv(M, tm),),
            in_specs=[
                pl.BlockSpec((tm, H), lambda i: (i, 0)),   # x rows tile
                pl.BlockSpec((H, H), lambda i: (0, 0)),    # dense weight (resident)
                pl.BlockSpec((1, H), lambda i: (0, 0)),    # dense bias
                pl.BlockSpec((1, H), lambda i: (0, 0)),    # LN gamma
                pl.BlockSpec((1, H), lambda i: (0, 0)),    # LN beta
            ],
            out_specs=pl.BlockSpec((tm, H), lambda i: (i, 0)),
        )
        kernel = functools.partial(_dense_kernel, eps=eps)
        semantics = ("parallel",)
    else:
        grid_spec = pltpu.PrefetchScalarGridSpec(
            num_scalar_prefetch=0,
            grid=(pl.cdiv(M, tm), H // tk),
            in_specs=[
                pl.BlockSpec((tm, tk), lambda i, k: (i, k)),   # x K-slab
                pl.BlockSpec((tk, H), lambda i, k: (k, 0)),    # weight K-slab
                pl.BlockSpec((1, H), lambda i, k: (0, 0)),     # dense bias
                pl.BlockSpec((1, H), lambda i, k: (0, 0)),     # LN gamma
                pl.BlockSpec((1, H), lambda i, k: (0, 0)),     # LN beta
            ],
            out_specs=pl.BlockSpec((tm, H), lambda i, k: (i, 0)),
            scratch_shapes=[pltpu.VMEM((tm, H), jnp.float32)],
        )
        kernel = functools.partial(_ktiled_kernel, eps=eps)
        semantics = ("parallel", "arbitrary")

    return pl.pallas_call(
        kernel,
        out_shape=jax.ShapeDtypeStruct((M, H), x2d.dtype),
        grid_spec=grid_spec,
        compiler_params=pltpu.CompilerParams(
            dimension_semantics=semantics,
            vmem_limit_bytes=vmem_limit),
        cost_estimate=cost,
    )(x2d, w, b2, g2, be2)


def init_params(key, hidden_size, dtype=jnp.float32):
    """Deterministic parameters for one PredictionHeadTransform."""
    kw, kb = jax.random.split(key)
    bound = 1.0 / math.sqrt(hidden_size)
    # Stored as (H_in, H_out) so the kernel computes x @ W (equivalent to
    # PyTorch's x @ weight.T with weight of shape (H_out, H_in)).
    w = jax.random.uniform(kw, (hidden_size, hidden_size), dtype, -bound, bound)
    b = jax.random.uniform(kb, (hidden_size,), dtype, -bound, bound)
    gamma = jnp.ones((hidden_size,), dtype)
    beta = jnp.zeros((hidden_size,), dtype)
    return {"w": w, "b": b, "gamma": gamma, "beta": beta}


def ab_embed_seq_concate_head(hidden_states, params_token, params_pair,
                              *, eps=1e-12, tm=256):
    """Forward of ABEmbedSeqConcateHead.

    hidden_states: (B, S, H)
    returns: (hidden_states_token (B, S, H), hidden_states_subClassHLPair (B, H))
    """
    B, S, H = hidden_states.shape

    # Token transform on all positions (large call: big row tiles, parallel grid).
    x_tok = hidden_states.reshape(B * S, H)
    y_tok = prediction_head_transform(
        x_tok, params_token["w"], params_token["b"],
        params_token["gamma"], params_token["beta"], eps=eps, tm=tm,
    ).reshape(B, S, H)

    # subClassHLPair transform on the CLS position (tiny call: single tile).
    # TODO(synk): fusing this into the token pallas_call would hide the pair
    # weight fetch, but a grid-invariant second output on the "parallel" row
    # axis races across v7x's two TensorCores, so it stays a separate call.
    x_cls = hidden_states[:, 0]
    y_cls = prediction_head_transform(
        x_cls, params_pair["w"], params_pair["b"],
        params_pair["gamma"], params_pair["beta"], eps=eps, tm=tm,
    )

    return y_tok, y_cls


# ---------------------------------------------------------------------------
# Pure-JAX reference
# ---------------------------------------------------------------------------

def _reference_head(x, p, eps=1e-12):
    x = x.astype(jnp.float32)
    h = x @ p["w"].astype(jnp.float32) + p["b"].astype(jnp.float32)
    h = h * 0.5 * (1.0 + jax.lax.erf(h / math.sqrt(2.0)))
    u = jnp.mean(h, axis=-1, keepdims=True)
    s = jnp.mean((h - u) ** 2, axis=-1, keepdims=True)
    h = (h - u) / jnp.sqrt(s + eps)
    return p["gamma"].astype(jnp.float32) * h + p["beta"].astype(jnp.float32)


def _reference(hidden_states, params_token, params_pair, eps=1e-12):
    return (_reference_head(hidden_states, params_token, eps),
            _reference_head(hidden_states[:, 0], params_pair, eps))


if __name__ == "__main__":
    B, S, H = 2, 8, 128
    key = jax.random.PRNGKey(0)
    k_in, k_tok, k_pair = jax.random.split(key, 3)

    # --- f32 path (matches the PyTorch module numerics) ---
    hidden_states = jax.random.normal(k_in, (B, S, H), jnp.float32)
    params_token = init_params(k_tok, H, jnp.float32)
    params_pair = init_params(k_pair, H, jnp.float32)

    y_tok, y_cls = ab_embed_seq_concate_head(hidden_states, params_token, params_pair)
    jax.block_until_ready((y_tok, y_cls))

    ref_tok, ref_cls = _reference(hidden_states, params_token, params_pair)
    assert y_tok.shape == (B, S, H) and y_cls.shape == (B, H)
    assert jnp.allclose(y_tok, ref_tok, atol=1e-4, rtol=1e-4)
    assert jnp.allclose(y_cls, ref_cls, atol=1e-4, rtol=1e-4)

    # --- bf16 smoke test (native-dtype MXU path, f32 accumulation/epilogue) ---
    hs_bf16 = hidden_states.astype(jnp.bfloat16)
    pt_bf16 = {k: v.astype(jnp.bfloat16) for k, v in params_token.items()}
    pp_bf16 = {k: v.astype(jnp.bfloat16) for k, v in params_pair.items()}
    yb_tok, yb_cls = ab_embed_seq_concate_head(hs_bf16, pt_bf16, pp_bf16)
    jax.block_until_ready((yb_tok, yb_cls))
    assert jnp.allclose(yb_tok.astype(jnp.float32), ref_tok, atol=0.15, rtol=0.15)
    assert jnp.allclose(yb_cls.astype(jnp.float32), ref_cls, atol=0.15, rtol=0.15)

    # --- K-tiled path check (forced; exercises the large-H code path) ---
    Hk = 256
    kx, kp = jax.random.split(jax.random.PRNGKey(1))
    xk = jax.random.normal(kx, (16, Hk), jnp.float32)
    pk = init_params(kp, Hk, jnp.float32)
    yk = prediction_head_transform(xk, pk["w"], pk["b"], pk["gamma"], pk["beta"],
                                   force_k_tiling=True)
    jax.block_until_ready(yk)
    assert jnp.allclose(yk, _reference_head(xk, pk), atol=1e-4, rtol=1e-4)

    print("KERNEL_OK")
</pallas_src>

<mosaic_0001>
module attributes {stable_mosaic.version = 11 : i64} {
  func.func @_dense_kernel(%arg0: i32, %arg1: memref<16x128xf32, #tpu.memory_space<vmem>>, %arg2: memref<128x128xf32, #tpu.memory_space<vmem>>, %arg3: memref<1x128xf32, #tpu.memory_space<vmem>>, %arg4: memref<1x128xf32, #tpu.memory_space<vmem>>, %arg5: memref<1x128xf32, #tpu.memory_space<vmem>>, %arg6: memref<16x128xf32, #tpu.memory_space<vmem>>) attributes {dimension_semantics = [#tpu.dimension_semantics<parallel>], iteration_bounds = array<i64: 1>, scalar_prefetch = 0 : i64, scratch_operands = 0 : i64, tpu.core_type = #tpu.core_type<tc>, window_params = [{transform_indices = @transform_0, window_bounds = array<i64: 16, 128>}, {pipeline_mode = #tpu.pipeline_mode<synchronous>, transform_indices = @transform_1, window_bounds = array<i64: 128, 128>}, {pipeline_mode = #tpu.pipeline_mode<synchronous>, transform_indices = @transform_2, window_bounds = array<i64: 1, 128>}, {pipeline_mode = #tpu.pipeline_mode<synchronous>, transform_indices = @transform_3, window_bounds = array<i64: 1, 128>}, {pipeline_mode = #tpu.pipeline_mode<synchronous>, transform_indices = @transform_4, window_bounds = array<i64: 1, 128>}, {transform_indices = @transform_5, window_bounds = array<i64: 16, 128>}]} {
    %c0 = arith.constant 0 : index
    %c0_0 = arith.constant 0 : index
    %0 = vector.load %arg1[%c0, %c0_0] : memref<16x128xf32, #tpu.memory_space<vmem>>, vector<16x128xf32>
    %c0_1 = arith.constant 0 : index
    %c0_2 = arith.constant 0 : index
    %1 = vector.load %arg2[%c0_1, %c0_2] : memref<128x128xf32, #tpu.memory_space<vmem>>, vector<128x128xf32>
    %cst = arith.constant dense<0.000000e+00> : vector<16x128xf32>
    %2 = tpu.matmul %0, %1, %cst {dimension_numbers = #tpu.dot_dimension_numbers<[1], [0], [0], [1], [0, 0, 1, 1], [], []>} : vector<16x128xf32>, vector<128x128xf32>, vector<16x128xf32> -> vector<16x128xf32>
    %c0_3 = arith.constant 0 : index
    %c0_4 = arith.constant 0 : index
    %3 = vector.load %arg3[%c0_3, %c0_4] : memref<1x128xf32, #tpu.memory_space<vmem>>, vector<1x128xf32>
    %4 = vector.broadcast %3 : vector<1x128xf32> to vector<16x128xf32>
    %5 = arith.addf %2, %4 : vector<16x128xf32>
    %c0_5 = arith.constant 0 : index
    %c0_6 = arith.constant 0 : index
    %6 = vector.load %arg4[%c0_5, %c0_6] : memref<1x128xf32, #tpu.memory_space<vmem>>, vector<1x128xf32>
    %c0_7 = arith.constant 0 : index
    %c0_8 = arith.constant 0 : index
    %7 = vector.load %arg5[%c0_7, %c0_8] : memref<1x128xf32, #tpu.memory_space<vmem>>, vector<1x128xf32>
    %cst_9 = arith.constant 0.707106769 : f32
    %8 = vector.broadcast %cst_9 : f32 to vector<16x128xf32>
    %9 = arith.mulf %5, %8 : vector<16x128xf32>
    %10 = math.erf %9 : vector<16x128xf32>
    %cst_10 = arith.constant 1.000000e+00 : f32
    %11 = vector.broadcast %cst_10 : f32 to vector<16x128xf32>
    %12 = arith.addf %11, %10 : vector<16x128xf32>
    %cst_11 = arith.constant 5.000000e-01 : f32
    %13 = vector.broadcast %cst_11 : f32 to vector<16x128xf32>
    %14 = arith.mulf %13, %12 : vector<16x128xf32>
    %15 = arith.mulf %5, %14 : vector<16x128xf32>
    %cst_12 = arith.constant dense<0.000000e+00> : vector<16xf32>
    %16 = vector.multi_reduction <add>, %15, %cst_12 [1] : vector<16x128xf32> to vector<16xf32>
    %17 = vector.shape_cast %16 : vector<16xf32> to vector<16x1xf32>
    %cst_13 = arith.constant 1.280000e+02 : f32
    %18 = vector.broadcast %cst_13 : f32 to vector<16x1xf32>
    %19 = arith.divf %17, %18 : vector<16x1xf32>
    %20 = arith.mulf %15, %15 : vector<16x128xf32>
    %cst_14 = arith.constant dense<0.000000e+00> : vector<16xf32>
    %21 = vector.multi_reduction <add>, %20, %cst_14 [1] : vector<16x128xf32> to vector<16xf32>
    %22 = vector.shape_cast %21 : vector<16xf32> to vector<16x1xf32>
    %cst_15 = arith.constant 1.280000e+02 : f32
    %23 = vector.broadcast %cst_15 : f32 to vector<16x1xf32>
    %24 = arith.divf %22, %23 : vector<16x1xf32>
    %25 = arith.mulf %19, %19 : vector<16x1xf32>
    %26 = arith.subf %24, %25 : vector<16x1xf32>
    %cst_16 = arith.constant 0.000000e+00 : f32
    %27 = vector.broadcast %cst_16 : f32 to vector<16x1xf32>
    %28 = arith.maximumf %26, %27 : vector<16x1xf32>
    %cst_17 = arith.constant 9.99999996E-13 : f32
    %29 = vector.broadcast %cst_17 : f32 to vector<16x1xf32>
    %30 = arith.addf %28, %29 : vector<16x1xf32>
    %31 = math.rsqrt %30 : vector<16x1xf32>
    %32 = vector.broadcast %19 : vector<16x1xf32> to vector<16x128xf32>
    %33 = arith.subf %15, %32 : vector<16x128xf32>
    %34 = vector.broadcast %6 : vector<1x128xf32> to vector<16x128xf32>
    %35 = vector.broadcast %31 : vector<16x1xf32> to vector<16x128xf32>
    %36 = arith.mulf %34, %35 : vector<16x128xf32>
    %37 = arith.mulf %33, %36 : vector<16x128xf32>
    %38 = vector.broadcast %7 : vector<1x128xf32> to vector<16x128xf32>
    %39 = arith.addf %37, %38 : vector<16x128xf32>
    %c0_18 = arith.constant 0 : index
    %c0_19 = arith.constant 0 : index
    %40 = vector.load %arg6[%c0_18, %c0_19] : memref<16x128xf32, #tpu.memory_space<vmem>>, vector<16x128xf32>
    tpu.vector_store %arg6[%c0_18, %c0_19], %39 {strides = array<i32>} : memref<16x128xf32, #tpu.memory_space<vmem>>, vector<16x128xf32>,
    return
  }
  func.func @transform_0(%arg0: i32) -> (i32, i32) {
    %c0_i32 = arith.constant 0 : i32
    %c0_i32_0 = arith.constant 0 : i32
    return %arg0, %c0_i32 : i32, i32
  }
  func.func @transform_1(%arg0: i32) -> (i32, i32) {
    %c0_i32 = arith.constant 0 : i32
    %c0_i32_0 = arith.constant 0 : i32
    %c0_i32_1 = arith.constant 0 : i32
    return %c0_i32, %c0_i32_0 : i32, i32
  }
  func.func @transform_2(%arg0: i32) -> (i32, i32) {
    %c0_i32 = arith.constant 0 : i32
    %c0_i32_0 = arith.constant 0 : i32
    %c0_i32_1 = arith.constant 0 : i32
    return %c0_i32, %c0_i32_0 : i32, i32
  }
  func.func @transform_3(%arg0: i32) -> (i32, i32) {
    %c0_i32 = arith.constant 0 : i32
    %c0_i32_0 = arith.constant 0 : i32
    %c0_i32_1 = arith.constant 0 : i32
    return %c0_i32, %c0_i32_0 : i32, i32
  }
  func.func @transform_4(%arg0: i32) -> (i32, i32) {
    %c0_i32 = arith.constant 0 : i32
    %c0_i32_0 = arith.constant 0 : i32
    %c0_i32_1 = arith.constant 0 : i32
    return %c0_i32, %c0_i32_0 : i32, i32
  }
  func.func @transform_5(%arg0: i32) -> (i32, i32) {
    %c0_i32 = arith.constant 0 : i32
    %c0_i32_0 = arith.constant 0 : i32
    return %arg0, %c0_i32 : i32, i32
  }
}

</mosaic_0001>

<llo_original>
// kernel: tpu_custom_call.1
$region0: #{tpu_custom_call.1}
  #allocation0 [shape = 'u32[]', space=smem, size = 0x4, offset = 0x4, fixed_abs, tag = 'smem constant byte address 0x4 - core index']
  #allocation1 [shape = 'u32[72,128]{1,0:T(1,128)}', space=vmem, size = 0x9000, scoped, tag = 'internal scratch']
  %s0 = inlined_call_operand.hbm [shape: f32[16,128], index: 0, kind: input, shape index: {}]
  %s1 = inlined_call_operand.hbm [shape: f32[128,128], index: 1, kind: input, shape index: {}]
  %s2 = inlined_call_operand.vmem [shape: f32[1,128], index: 2, kind: input, shape index: {}]
  %s3 = inlined_call_operand.vmem [shape: f32[1,128], index: 3, kind: input, shape index: {}]
  %s4 = inlined_call_operand.vmem [shape: f32[1,128], index: 4, kind: input, shape index: {}]
  %s5 = inlined_call_operand.hbm [shape: f32[16,128], index: 5, kind: output, shape index: {}]
  %s6 = sld [smem:[#allocation0]]
  $region38: #{tpu_custom_call.1} parent=0
    _
  %s8 = ssub.s32 1, %s6
  %s9 = scalar_select 0, %s8, %s6
  $region1: #{tpu_custom_call.1} parent=0
    #allocation2 [shape = 'u8[8192]{0}', space=vmem, size = 0x2000, scoped, tag = 'input window, operand 0, single buffered']
    #allocation3 [shape = 's32[1]{0}', space=sflag, size = 0x4, scoped, tag = 'scoped memory for tpu_custom_call.1']
    #allocation4 [shape = 's32[1]{0}', space=sflag, size = 0x4, scoped, tag = 'scoped memory for tpu_custom_call.1']
    #allocation5 [shape = 'u8[65536]{0}', space=vmem, size = 0x10000, scoped, tag = 'input window, operand 1, single buffered']
    #allocation6 [shape = 's32[1]{0}', space=sflag, size = 0x4, scoped, tag = 'scoped memory for tpu_custom_call.1']
    #allocation7 [shape = 'u8[8192]{0}', space=vmem, size = 0x2000, scoped, tag = 'output window, operand 0, single buffered']
    %10 = vsyncpa [#allocation3], 0
    %11 = vsyncpa [#allocation6], 0
    %12 = vsyncpa [#allocation4], 0
    // Predicated region
    $region2: #{tpu_custom_call.1} parent=1 // pred_check
      _
    $region3: #{tpu_custom_call.1} parent=1 // pred_check_branch
      %14 = sbr.rel (0) target = $region5
    $region4: #{tpu_custom_call.1} parent=1 // pred_region
      %16 = vsyncadd [#allocation3], 0
      %s17 = sshll.u32 %s0, 4
      %s18 = int_to_ptr.hbm [resolvable:$true] %s17
      %s19 = sshll.u32 [#allocation2], 4
      %s20 = int_to_ptr.vmem [resolvable:$true] %s19
      %25 = dma.hbm_to_vmem [thread:$0]  %s18, 256, %s20, [#allocation3], 128, 128, 8
    $region5: #{tpu_custom_call.1} parent=1 // pred_fallthru
      _
    // Predicated region
    $region6: #{tpu_custom_call.1} parent=1 // pred_check
      _
    $region7: #{tpu_custom_call.1} parent=1 // pred_check_branch
      %27 = sbr.rel (0) target = $region9
    $region8: #{tpu_custom_call.1} parent=1 // pred_region
      %29 = vsyncadd [#allocation6], 0
      %s30 = sshll.u32 %s1, 4
      %s31 = int_to_ptr.hbm [resolvable:$true] %s30
      %s32 = sshll.u32 [#allocation5], 4
      %s33 = int_to_ptr.vmem [resolvable:$true] %s32
      %38 = dma.hbm_to_vmem [thread:$0]  %s31, 2048, %s33, [#allocation6], 128, 128, 8
    $region9: #{tpu_custom_call.1} parent=1 // pred_fallthru
      _
    // Predicated region
    $region10: #{tpu_custom_call.1} parent=1 // pred_check
      _
    $region11: #{tpu_custom_call.1} parent=1 // pred_check_branch
      %40 = sbr.rel (0) target = $region13
    $region12: #{tpu_custom_call.1} parent=1 // pred_region
      _
    $region13: #{tpu_custom_call.1} parent=1 // pred_fallthru
      _
    // Predicated region
    $region14: #{tpu_custom_call.1} parent=1 // pred_check
      _
    $region15: #{tpu_custom_call.1} parent=1 // pred_check_branch
      %42 = sbr.rel (0) target = $region17
    $region16: #{tpu_custom_call.1} parent=1 // pred_region
      _
    $region17: #{tpu_custom_call.1} parent=1 // pred_fallthru
      _
    // Predicated region
    $region18: #{tpu_custom_call.1} parent=1 // pred_check
      _
    $region19: #{tpu_custom_call.1} parent=1 // pred_check_branch
      %44 = sbr.rel (0) target = $region21
    $region20: #{tpu_custom_call.1} parent=1 // pred_region
      _
    $region21: #{tpu_custom_call.1} parent=1 // pred_fallthru
      _
    // Predicated region
    $region22: #{tpu_custom_call.1} parent=1 // pred_check
      _
    $region23: #{tpu_custom_call.1} parent=1 // pred_check_branch
      %46 = sbr.rel (0) target = $region25
    $region24: #{tpu_custom_call.1} parent=1 // pred_region
      %48 = dma.done [#allocation3], 256
    $region25: #{tpu_custom_call.1} parent=1 // pred_fallthru
      _
    // Predicated region
    $region26: #{tpu_custom_call.1} parent=1 // pred_check
      _
    $region27: #{tpu_custom_call.1} parent=1 // pred_check_branch
      %50 = sbr.rel (0) target = $region29
    $region28: #{tpu_custom_call.1} parent=1 // pred_region
      %52 = dma.done [#allocation6], 2048
    $region29: #{tpu_custom_call.1} parent=1 // pred_fallthru
      _
    %v53 = vld [vmem:[#allocation2] sm:$0xff]
    %v54 = vld [vmem:[#allocation2 + $0x8] sm:$0xff]
    %v55 = vld [vmem:[#allocation5] sm:$0xff]
    %v56 = vld [vmem:[#allocation5 + $0x8] sm:$0xff]
    %v57 = vld [vmem:[#allocation5 + $0x10] sm:$0xff]
    %v58 = vld [vmem:[#allocation5 + $0x18] sm:$0xff]
    %v59 = vld [vmem:[#allocation5 + $0x20] sm:$0xff]
    %v60 = vld [vmem:[#allocation5 + $0x28] sm:$0xff]
    %v61 = vld [vmem:[#allocation5 + $0x30] sm:$0xff]
    %v62 = vld [vmem:[#allocation5 + $0x38] sm:$0xff]
    %v63 = vld [vmem:[#allocation5 + $0x40] sm:$0xff]
    %v64 = vld [vmem:[#allocation5 + $0x48] sm:$0xff]
    %v65 = vld [vmem:[#allocation5 + $0x50] sm:$0xff]
    %v66 = vld [vmem:[#allocation5 + $0x58] sm:$0xff]
    %v67 = vld [vmem:[#allocation5 + $0x60] sm:$0xff]
    %v68 = vld [vmem:[#allocation5 + $0x68] sm:$0xff]
    %v69 = vld [vmem:[#allocation5 + $0x70] sm:$0xff]
    %v70 = vld [vmem:[#allocation5 + $0x78] sm:$0xff]
    %v71 = vld [vmem:[%s2] sm:$0x1]
    %v73 = vperm.slane %v71, 0
    %75 = vmatpush.msra.mxu0 %v70
    %76 = vmatpush.msra.mxu0 %v69
    %77 = vmatpush.msra.mxu0 %v68
    %78 = vmatpush.msra.mxu0 %v67
    %79 = vmatpush.msra.mxu0 %v66
    %80 = vmatpush.msra.mxu0 %v65
    %81 = vmatpush.msra.mxu0 %v64
    %82 = vmatpush.msra.mxu0 %v63
    %83 = vmatpush.msra.mxu0 %v62
    %84 = vmatpush.msra.mxu0 %v61
    %85 = vmatpush.msra.mxu0 %v60
    %86 = vmatpush.msra.mxu0 %v59
    %87 = vmatpush.msra.mxu0 %v58
    %88 = vmatpush.msra.mxu0 %v57
    %89 = vmatpush.msra.mxu0 %v56
    %90 = vmatpush.msra.mxu0 %v55
    %91 = vmatmul.f32.gmra.mxu0 %v53
    %v92 = vpop.f32.mrf.mxu0
    %v93 = vadd.f32 %v73, %v92
    %94 = vmatmul.f32.gmra.mxu0 %v54
    %v95 = vpop.f32.mrf.mxu0
    %v96 = vadd.f32 %v73, %v95
    %97 = vdwg.mxu0
    %v98 = vld [vmem:[%s3] sm:$0x1]
    %v99 = vld [vmem:[%s4] sm:$0x1]
    %v100 = vmul.f32 %v93, 0.70710677
    %v101 = vmul.f32 %v96, 0.70710677
    %v102 = vmul.f32 %v100, %v100
    %v103 = vmin.f32 16.0, %v102
    %v104 = vmul.f32 %v103, 2.1237322e-06
    %v105 = vadd.f32 %v104, 0.00028619796
    %v106 = vmul.f32 %v103, %v105
    %v107 = vadd.f32 %v106, 0.0036580483
    %v108 = vmul.f32 %v103, %v107
    %v109 = vadd.f32 %v108, 0.05243302
    %v110 = vmul.f32 %v103, %v109
    %v111 = vadd.f32 %v110, 0.18741608
    %v112 = vmul.f32 %v103, %v111
    %v113 = vadd.f32 %v112, 1.1283791
    %v114 = vmul.f32 %v100, %v113
    %v115 = vmul.f32 %v103, 3.8918573e-05
    %v116 = vadd.f32 %v115, 0.001143296
    %v117 = vmul.f32 %v103, %v116
    %v118 = vadd.f32 %v117, 0.014752088
    %v119 = vmul.f32 %v103, %v118
    %v120 = vadd.f32 %v119, 0.112945676
    %v121 = vmul.f32 %v103, %v120
    %v122 = vadd.f32 %v121, 0.4994258
    %v123 = vmul.f32 %v103, %v122
    %v124 = vadd.f32 %v123, 1.0
    %v125 = vrcp.pop %v124
    %v126 = vmul.f32 %v124, %v125
    %v127 = vsub.f32 1.0, %v126
    %v128 = vmul.f32 %v125, %v127
    %v129 = vadd.f32 %v125, %v128
    %vm130 = vweird.f32 %v124
    %vm131 = vweird.f32 %v125
    %vm132 = vmor %vm130, %vm131
    %v133 = vsel %vm132, %v125, %v129
    %v134 = vand.u32 2147483647, %v124
    %vm135 = vcmp.eq.f32.partialorder %v134, 8.507059e+37
    %v136 = vand.u32 %v124, 2147483648
    %v137 = vor.u32 1.1754944e-38, %v136
    %v138 = vsel %vm135, %v137, %v133
    %v139 = vmul.f32 %v114, %v138
    %v140 = vmin.f32 %v139, 1.0
    %v141 = vmax.f32 %v140, -1.0
    %v142 = vmul.f32 %v101, %v101
    %v143 = vmin.f32 16.0, %v142
    %v144 = vmul.f32 %v143, 2.1237322e-06
    %v145 = vadd.f32 %v144, 0.00028619796
    %v146 = vmul.f32 %v143, %v145
    %v147 = vadd.f32 %v146, 0.0036580483
    %v148 = vmul.f32 %v143, %v147
    %v149 = vadd.f32 %v148, 0.05243302
    %v150 = vmul.f32 %v143, %v149
    %v151 = vadd.f32 %v150, 0.18741608
    %v152 = vmul.f32 %v143, %v151
    %v153 = vadd.f32 %v152, 1.1283791
    %v154 = vmul.f32 %v101, %v153
    %v155 = vmul.f32 %v143, 3.8918573e-05
    %v156 = vadd.f32 %v155, 0.001143296
    %v157 = vmul.f32 %v143, %v156
    %v158 = vadd.f32 %v157, 0.014752088
    %v159 = vmul.f32 %v143, %v158
    %v160 = vadd.f32 %v159, 0.112945676
    %v161 = vmul.f32 %v143, %v160
    %v162 = vadd.f32 %v161, 0.4994258
    %v163 = vmul.f32 %v143, %v162
    %v164 = vadd.f32 %v163, 1.0
    %v165 = vrcp.pop %v164
    %v166 = vmul.f32 %v164, %v165
    %v167 = vsub.f32 1.0, %v166
    %v168 = vmul.f32 %v165, %v167
    %v169 = vadd.f32 %v165, %v168
    %vm170 = vweird.f32 %v164
    %vm171 = vweird.f32 %v165
    %vm172 = vmor %vm170, %vm171
    %v173 = vsel %vm172, %v165, %v169
    %v174 = vand.u32 2147483647, %v164
    %vm175 = vcmp.eq.f32.partialorder %v174, 8.507059e+37
    %v176 = vand.u32 %v164, 2147483648
    %v177 = vor.u32 1.1754944e-38, %v176
    %v178 = vsel %vm175, %v177, %v173
    %v179 = vmul.f32 %v154, %v178
    %v180 = vmin.f32 %v179, 1.0
    %v181 = vmax.f32 %v180, -1.0
    %v182 = vadd.f32 %v141, 1.0
    %v183 = vadd.f32 %v181, 1.0
    %v184 = vmul.f32 %v182, 0.5
    %v185 = vmul.f32 %v183, 0.5
    %v186 = vmul.f32 %v93, %v184
    %v187 = vmul.f32 %v96, %v185
    %188 = vadd.xlane.f32.xlu0 %v186
    %v189 = vpop.xlane.xlu0 %188
    %190 = vadd.xlane.f32.xlu0 %v187
    %v191 = vpop.xlane.xlu0 %190
    %v192 = vrcp.pop 128.0
    %v193 = vmul.f32 128.0, %v192
    %v194 = vsub.f32 1.0, %v193
    %v195 = vmul.f32 %v192, %v194
    %v196 = vadd.f32 %v192, %v195
    %vm197 = vweird.f32 %v192
    %v198 = vsel %vm197, %v192, %v196
    %v199 = vmul.f32 %v189, %v198
    %v200 = vmul.f32 %v191, %v198
    %v201 = vmul.f32 %v186, %v186
    %v202 = vmul.f32 %v187, %v187
    %203 = vadd.xlane.f32.xlu0 %v201
    %v204 = vpop.xlane.xlu0 %203
    %205 = vadd.xlane.f32.xlu0 %v202
    %v206 = vpop.xlane.xlu0 %205
    %v207 = vmul.f32 %v204, %v198
    %v208 = vmul.f32 %v206, %v198
    %v209 = vmul.f32 %v199, %v199
    %v210 = vmul.f32 %v200, %v200
    %v211 = vsub.f32 %v207, %v209
    %v212 = vsub.f32 %v208, %v210
    %v213 = vmax.f32 %v211, 0.0
    %v214 = vmax.f32 %v212, 0.0
    %v215 = vadd.f32 %v213, 1e-12
    %v216 = vadd.f32 %v214, 1e-12
    %v217 = vrsqrt.pop %v215
    %v218 = vmul.f32 %v217, %v215
    %v219 = vmul.f32 %v218, %v217
    %v220 = vmul.f32 0.5, %v219
    %v221 = vsub.f32 1.5, %v220
    %v222 = vmul.f32 %v217, %v221
    %vm223 = vweird.f32 %v215
    %vm224 = vweird.f32 %v217
    %vm225 = vmor %vm223, %vm224
    %v226 = vsel %vm225, %v217, %v222
    %v227 = vrsqrt.pop %v216
    %v228 = vmul.f32 %v227, %v216
    %v229 = vmul.f32 %v228, %v227
    %v230 = vmul.f32 0.5, %v229
    %v231 = vsub.f32 1.5, %v230
    %v232 = vmul.f32 %v227, %v231
    %vm233 = vweird.f32 %v216
    %vm234 = vweird.f32 %v227
    %vm235 = vmor %vm233, %vm234
    %v236 = vsel %vm235, %v227, %v232
    %v237 = vsub.f32 %v186, %v199
    %v238 = vsub.f32 %v187, %v200
    %v240 = vperm.slane %v98, 0
    %v242 = vmul.f32 %v240, %v226
    %v243 = vmul.f32 %v240, %v236
    %v244 = vmul.f32 %v237, %v242
    %v245 = vmul.f32 %v238, %v243
    %v247 = vperm.slane %v99, 0
    %v249 = vadd.f32 %v244, %v247
    %v250 = vadd.f32 %v245, %v247
    %251 = vst [vmem:[#allocation7] sm:$0xff] %v249
    %252 = vst [vmem:[#allocation7 + $0x8] sm:$0xff] %v250
    // Predicated region
    $region30: #{tpu_custom_call.1} parent=1 // pred_check
      _
    $region31: #{tpu_custom_call.1} parent=1 // pred_check_branch
      %254 = sbr.rel (0) target = $region33
    $region32: #{tpu_custom_call.1} parent=1 // pred_region
      %256 = vsyncadd [#allocation4], 0
      %s257 = sshll.u32 [#allocation7], 4
      %s258 = int_to_ptr.vmem [resolvable:$true] %s257
      %s259 = sshll.u32 %s5, 4
      %s260 = int_to_ptr.hbm [resolvable:$true] %s259
      %265 = dma.vmem_to_hbm [thread:$0]  %s258, 256, %s260, [#allocation4], 128, 128, 8
    $region33: #{tpu_custom_call.1} parent=1 // pred_fallthru
      _
    // Predicated region
    $region34: #{tpu_custom_call.1} parent=1 // pred_check
      _
    $region35: #{tpu_custom_call.1} parent=1 // pred_check_branch
      %267 = sbr.rel (0) target = $region37
    $region36: #{tpu_custom_call.1} parent=1 // pred_region
      %269 = dma.done [#allocation4], 256
    $region37: #{tpu_custom_call.1} parent=1 // pred_fallthru
      _
    %270 = vsyncpa [#allocation3], 1
    %271 = vsyncpa [#allocation6], 1
    %272 = vsyncpa [#allocation4], 1

</llo_original>
